<compile_context>
chip_gen: v5e
topology: v5e:2x2
jax: 0.10.0
libtpu: 0.0.40
codegen_flags: <defaults>
</compile_context>

<pallas_src>
import functools
import math

import jax
import jax.numpy as jnp
import numpy as np
from jax.experimental import pallas as pl
from jax.experimental.pallas import tpu as pltpu


# ----------------------------------------------------------------------------
# Init-time fusion of the four branch weights (batch-invariant, done once)
# ----------------------------------------------------------------------------
def fuse_branch_weights(branch_weights, kernel_sizes, paddings):
    """Fold the parallel Conv1d branches into one (Cout, K*Cin) bf16 weight.

    Branch i's taps land at unified tap offsets [p_max - p_i, p_max - p_i + k_i)
    of a virtual conv with kernel K = max(k_i), padding p_max = max(p_i).
    Requires 2*p_i - k_i constant across branches (same condition torch.cat
    itself needs for equal branch output lengths).
    """
    k_max = int(max(kernel_sizes))
    p_max = int(max(paddings))
    assert len({2 * p - k for p, k in zip(paddings, kernel_sizes)}) == 1, \
        "branch output lengths differ; torch.cat would fail"

    cin = int(branch_weights[0].shape[1])
    cout = sum(int(w.shape[0]) for w in branch_weights)
    w_taps = np.zeros((k_max, cout, cin), np.float32)          # (tap, Cout, Cin)
    co = 0
    for w, k, p in zip(branch_weights, kernel_sizes, paddings):
        w = np.asarray(w, np.float32)                          # (C, Cin, k)
        off = p_max - p
        w_taps[off:off + k, co:co + w.shape[0], :] = np.transpose(w, (2, 0, 1))
        co += w.shape[0]
    # (tap, Cout, Cin) -> (Cout, tap*Cin); row order matches in-kernel im2col.
    w_flat = np.transpose(w_taps, (1, 0, 2)).reshape(cout, k_max * cin)
    return jnp.asarray(w_flat, jnp.bfloat16), k_max, p_max


# ----------------------------------------------------------------------------
# Kernels
# ----------------------------------------------------------------------------
def _im2col_kernel(x_ref, w_ref, out_ref, col_ref, *,
                   taps, p_max, l_in, l_out, bb, cin):
    # x_ref  : (bb, Cin, L)        unpadded f32 input block
    # w_ref  : (Cout, taps*Cin)    fused bf16 weight (VMEM-resident)
    # out_ref: (bb, Cout, L_out)   lane-dense f32 output block
    # col_ref: (taps*Cin, bb*L_out) bf16 im2col scratch
    #
    # Zero fill supplies the conv's implicit zero padding (replaces jnp.pad).
    col_ref[...] = jnp.zeros_like(col_ref)
    for b in range(bb):                       # static, bb is small
        base = b * l_out
        for t in range(taps):                 # static tap loop
            c0 = max(0, p_max - t)                       # first valid out col
            c1 = min(l_out, l_in + p_max - t)            # one past last valid
            if c1 <= c0:
                continue
            x0 = c0 + t - p_max                          # start in unpadded x
            col_ref[t * cin:(t + 1) * cin, base + c0:base + c1] = (
                x_ref[b, :, x0:x0 + (c1 - c0)].astype(col_ref.dtype))
    # One wide MXU matmul: (Cout, taps*Cin) @ (taps*Cin, bb*L_out), f32 acc.
    res = jnp.dot(w_ref[...], col_ref[...], preferred_element_type=jnp.float32)
    for b in range(bb):
        out_ref[b] = res[:, b * l_out:(b + 1) * l_out]


def _per_tap_kernel(x_ref, w_ref, out_ref, acc_ref, *,
                    taps, p_max, l_in, l_out, bb, cin):
    # Large-Cin path (Cin >= 128): per-tap matmuls already have a full
    # contraction dim, so skip the taps x im2col VMEM blow-up.
    acc_ref[...] = jnp.zeros_like(acc_ref)
    for b in range(bb):
        base = b * l_out
        for t in range(taps):
            c0 = max(0, p_max - t)
            c1 = min(l_out, l_in + p_max - t)
            if c1 <= c0:
                continue
            x0 = c0 + t - p_max
            xs = x_ref[b, :, x0:x0 + (c1 - c0)].astype(jnp.bfloat16)
            wt = w_ref[:, t * cin:(t + 1) * cin]
            acc_ref[:, base + c0:base + c1] += jnp.dot(
                wt, xs, preferred_element_type=jnp.float32)
    for b in range(bb):
        out_ref[b] = acc_ref[:, b * l_out:(b + 1) * l_out]


# ----------------------------------------------------------------------------
# Wrapper
# ----------------------------------------------------------------------------
def _pick_batch_block(batch, cin, cout, l_in, l_dense, taps,
                      vmem_budget=24 * 1024 * 1024):
    """Largest divisor of batch keeping matmul N <= ~512 lanes and VMEM modest
    (budget sized for v7x's 64 MiB physical / 32 MiB scoped VMEM)."""
    best = 1
    for bb in range(1, batch + 1):
        if batch % bb:
            continue
        per_step = (2 * bb * cin * l_in * 4          # double-buffered x (f32)
                    + 2 * bb * cout * l_dense * 4    # double-buffered out (f32)
                    + taps * cin * bb * l_dense * 2  # im2col scratch (bf16)
                    + cout * taps * cin * 2)         # resident weight (bf16)
        if bb > 1 and (bb * l_dense > 512 or per_step > vmem_budget):
            continue
        best = bb
    return best


@functools.partial(jax.jit, static_argnames=("k_max", "p_max", "stride"))
def branch_conv1d_forward(x, w_flat, *, k_max, p_max, stride=1):
    """x: (B, Cin, L) f32, w_flat: (Cout, k_max*Cin) bf16 -> (B, Cout, L_out)."""
    batch, cin, l_in = x.shape
    cout = w_flat.shape[0]
    l_dense = l_in + 2 * p_max - k_max + 1     # stride-1 output length
    bb = _pick_batch_block(batch, cin, cout, l_in, l_dense, k_max)

    if cin < 128:
        kernel = functools.partial(_im2col_kernel, taps=k_max, p_max=p_max,
                                   l_in=l_in, l_out=l_dense, bb=bb, cin=cin)
        scratch = [pltpu.VMEM((k_max * cin, bb * l_dense), jnp.bfloat16)]
    else:
        kernel = functools.partial(_per_tap_kernel, taps=k_max, p_max=p_max,
                                   l_in=l_in, l_out=l_dense, bb=bb, cin=cin)
        scratch = [pltpu.VMEM((cout, bb * l_dense), jnp.float32)]

    cost = pl.CostEstimate(
        flops=2 * batch * cout * k_max * cin * l_dense,
        transcendentals=0,
        bytes_accessed=(x.size * x.dtype.itemsize
                        + w_flat.size * w_flat.dtype.itemsize
                        + batch * cout * l_dense * 4))

    # NOTE: one block covers the full length per batch group; for very long
    # sequences this would additionally be tiled over L_out with a halo.
    out = pl.pallas_call(
        kernel,
        out_shape=jax.ShapeDtypeStruct((batch, cout, l_dense), jnp.float32),
        grid=(batch // bb,),
        in_specs=[
            pl.BlockSpec((bb, cin, l_in), lambda i: (i, 0, 0)),
            pl.BlockSpec((cout, k_max * cin), lambda i: (0, 0)),  # resident
        ],
        out_specs=pl.BlockSpec((bb, cout, l_dense), lambda i: (i, 0, 0)),
        scratch_shapes=scratch,
        compiler_params=pltpu.CompilerParams(
            dimension_semantics=("parallel",),
            vmem_limit_bytes=32 * 1024 * 1024),
        cost_estimate=cost,
    )(x, w_flat)

    if stride > 1:
        # No strided lane slices in-kernel: dense compute + downsample.
        # TODO(synk): stride-decompose x over L for large strides instead.
        out = out[:, :, ::stride]
    return out


# ----------------------------------------------------------------------------
# Pure-JAX reference mirroring the PyTorch forward (4 convs + concat)
# ----------------------------------------------------------------------------
def branch_conv1d_reference(x, branch_weights, kernel_sizes, paddings, stride):
    outs = []
    for w, _, p in zip(branch_weights, kernel_sizes, paddings):
        outs.append(jax.lax.conv_general_dilated(
            x, w, window_strides=(stride,), padding=[(p, p)],
            dimension_numbers=("NCH", "OIH", "NCH"),
            precision=jax.lax.Precision.HIGHEST))
    return jnp.concatenate(outs, axis=1)


if __name__ == "__main__":
    batch = 2
    in_channels = 16
    out_channels = 32          # C = out_channels // 4 = 8 per branch
    length = 128               # output stays lane-dense (multiple of 128)
    stride = 1
    kernel_sizes = (3, 5, 7, 9)   # k1..k4 (module-level globals in the spec)
    paddings = (1, 2, 3, 4)       # p1..p4 ("same"-length multi-scale config)
    C = out_channels // 4

    key = jax.random.PRNGKey(0)
    k_x, *k_ws = jax.random.split(key, 1 + len(kernel_sizes))

    x = jax.random.normal(k_x, (batch, in_channels, length), dtype=jnp.float32)

    # Conv1d default init: uniform(-stdv, stdv), stdv = 1/sqrt(Cin * k)
    branch_weights = []
    for kk, ksz in zip(k_ws, kernel_sizes):
        stdv = 1.0 / math.sqrt(in_channels * ksz)
        branch_weights.append(jax.random.uniform(
            kk, (C, in_channels, ksz), jnp.float32, minval=-stdv, maxval=stdv))

    w_flat, k_max, p_max = fuse_branch_weights(
        [np.asarray(w) for w in branch_weights], kernel_sizes, paddings)

    out = branch_conv1d_forward(x, w_flat, k_max=k_max, p_max=p_max,
                                stride=stride)
    out = jax.block_until_ready(out)

    ref = jax.block_until_ready(branch_conv1d_reference(
        x, branch_weights, kernel_sizes, paddings, stride))

    # bf16 MXU operands with f32 accumulation -> looser tolerance than pure f32.
    np.testing.assert_allclose(np.asarray(out), np.asarray(ref),
                               rtol=2e-2, atol=2e-2)
    print("KERNEL_OK")
</pallas_src>

<mosaic_0001>
module attributes {stable_mosaic.version = 11 : i64} {
  func.func @_im2col_kernel(%arg0: i32, %arg1: memref<2x16x128xf32, #tpu.memory_space<vmem>>, %arg2: memref<32x144xbf16, #tpu.memory_space<vmem>>, %arg3: memref<2x32x128xf32, #tpu.memory_space<vmem>>, %arg4: memref<144x256xbf16, #tpu.memory_space<vmem>>) attributes {dimension_semantics = [#tpu.dimension_semantics<parallel>], iteration_bounds = array<i64: 1>, scalar_prefetch = 0 : i64, scratch_operands = 1 : i64, tpu.core_type = #tpu.core_type<tc>, window_params = [{transform_indices = @transform_0, window_bounds = array<i64: 2, 16, 128>}, {pipeline_mode = #tpu.pipeline_mode<synchronous>, transform_indices = @transform_1, window_bounds = array<i64: 32, 144>}, {transform_indices = @transform_2, window_bounds = array<i64: 2, 32, 128>}]} {
    %cst = arith.constant 0.000000e+00 : bf16
    %0 = vector.broadcast %cst : bf16 to vector<144x256xbf16>
    %c0 = arith.constant 0 : index
    %c0_0 = arith.constant 0 : index
    %1 = vector.load %arg4[%c0, %c0_0] : memref<144x256xbf16, #tpu.memory_space<vmem>>, vector<144x256xbf16>
    tpu.vector_store %arg4[%c0, %c0_0], %0 {strides = array<i32>} : memref<144x256xbf16, #tpu.memory_space<vmem>>, vector<144x256xbf16>,
    %c0_1 = arith.constant 0 : index
    %c0_2 = arith.constant 0 : index
    %c0_3 = arith.constant 0 : index
    %2 = vector.load %arg1[%c0_1, %c0_2, %c0_3] : memref<2x16x128xf32, #tpu.memory_space<vmem>>, vector<1x16x124xf32>
    %3 = vector.shape_cast %2 : vector<1x16x124xf32> to vector<16x124xf32>
    %4 = arith.truncf %3 : vector<16x124xf32> to vector<16x124xbf16>
    %c0_4 = arith.constant 0 : index
    %c4 = arith.constant 4 : index
    %5 = vector.load %arg4[%c0_4, %c4] : memref<144x256xbf16, #tpu.memory_space<vmem>>, vector<16x124xbf16>
    tpu.vector_store %arg4[%c0_4, %c4], %4 {strides = array<i32>} : memref<144x256xbf16, #tpu.memory_space<vmem>>, vector<16x124xbf16>,
    %c0_5 = arith.constant 0 : index
    %c0_6 = arith.constant 0 : index
    %c0_7 = arith.constant 0 : index
    %6 = vector.load %arg1[%c0_5, %c0_6, %c0_7] : memref<2x16x128xf32, #tpu.memory_space<vmem>>, vector<1x16x125xf32>
    %7 = vector.shape_cast %6 : vector<1x16x125xf32> to vector<16x125xf32>
    %8 = arith.truncf %7 : vector<16x125xf32> to vector<16x125xbf16>
    %c16 = arith.constant 16 : index
    %c3 = arith.constant 3 : index
    %9 = vector.load %arg4[%c16, %c3] : memref<144x256xbf16, #tpu.memory_space<vmem>>, vector<16x125xbf16>
    tpu.vector_store %arg4[%c16, %c3], %8 {strides = array<i32>} : memref<144x256xbf16, #tpu.memory_space<vmem>>, vector<16x125xbf16>,
    %c0_8 = arith.constant 0 : index
    %c0_9 = arith.constant 0 : index
    %c0_10 = arith.constant 0 : index
    %10 = vector.load %arg1[%c0_8, %c0_9, %c0_10] : memref<2x16x128xf32, #tpu.memory_space<vmem>>, vector<1x16x126xf32>
    %11 = vector.shape_cast %10 : vector<1x16x126xf32> to vector<16x126xf32>
    %12 = arith.truncf %11 : vector<16x126xf32> to vector<16x126xbf16>
    %c32 = arith.constant 32 : index
    %c2 = arith.constant 2 : index
    %13 = vector.load %arg4[%c32, %c2] : memref<144x256xbf16, #tpu.memory_space<vmem>>, vector<16x126xbf16>
    tpu.vector_store %arg4[%c32, %c2], %12 {strides = array<i32>} : memref<144x256xbf16, #tpu.memory_space<vmem>>, vector<16x126xbf16>,
    %c0_11 = arith.constant 0 : index
    %c0_12 = arith.constant 0 : index
    %c0_13 = arith.constant 0 : index
    %14 = vector.load %arg1[%c0_11, %c0_12, %c0_13] : memref<2x16x128xf32, #tpu.memory_space<vmem>>, vector<1x16x127xf32>
    %15 = vector.shape_cast %14 : vector<1x16x127xf32> to vector<16x127xf32>
    %16 = arith.truncf %15 : vector<16x127xf32> to vector<16x127xbf16>
    %c48 = arith.constant 48 : index
    %c1 = arith.constant 1 : index
    %17 = vector.load %arg4[%c48, %c1] : memref<144x256xbf16, #tpu.memory_space<vmem>>, vector<16x127xbf16>
    tpu.vector_store %arg4[%c48, %c1], %16 {strides = array<i32>} : memref<144x256xbf16, #tpu.memory_space<vmem>>, vector<16x127xbf16>,
    %c0_14 = arith.constant 0 : index
    %c0_15 = arith.constant 0 : index
    %c0_16 = arith.constant 0 : index
    %18 = vector.load %arg1[%c0_14, %c0_15, %c0_16] : memref<2x16x128xf32, #tpu.memory_space<vmem>>, vector<1x16x128xf32>
    %19 = vector.shape_cast %18 : vector<1x16x128xf32> to vector<16x128xf32>
    %20 = arith.truncf %19 : vector<16x128xf32> to vector<16x128xbf16>
    %c64 = arith.constant 64 : index
    %c0_17 = arith.constant 0 : index
    %21 = vector.load %arg4[%c64, %c0_17] : memref<144x256xbf16, #tpu.memory_space<vmem>>, vector<16x128xbf16>
    tpu.vector_store %arg4[%c64, %c0_17], %20 {strides = array<i32>} : memref<144x256xbf16, #tpu.memory_space<vmem>>, vector<16x128xbf16>,
    %c0_18 = arith.constant 0 : index
    %c0_19 = arith.constant 0 : index
    %c1_20 = arith.constant 1 : index
    %22 = vector.load %arg1[%c0_18, %c0_19, %c1_20] : memref<2x16x128xf32, #tpu.memory_space<vmem>>, vector<1x16x127xf32>
    %23 = vector.shape_cast %22 : vector<1x16x127xf32> to vector<16x127xf32>
    %24 = arith.truncf %23 : vector<16x127xf32> to vector<16x127xbf16>
    %c80 = arith.constant 80 : index
    %c0_21 = arith.constant 0 : index
    %25 = vector.load %arg4[%c80, %c0_21] : memref<144x256xbf16, #tpu.memory_space<vmem>>, vector<16x127xbf16>
    tpu.vector_store %arg4[%c80, %c0_21], %24 {strides = array<i32>} : memref<144x256xbf16, #tpu.memory_space<vmem>>, vector<16x127xbf16>,
    %c0_22 = arith.constant 0 : index
    %c0_23 = arith.constant 0 : index
    %c2_24 = arith.constant 2 : index
    %26 = vector.load %arg1[%c0_22, %c0_23, %c2_24] : memref<2x16x128xf32, #tpu.memory_space<vmem>>, vector<1x16x126xf32>
    %27 = vector.shape_cast %26 : vector<1x16x126xf32> to vector<16x126xf32>
    %28 = arith.truncf %27 : vector<16x126xf32> to vector<16x126xbf16>
    %c96 = arith.constant 96 : index
    %c0_25 = arith.constant 0 : index
    %29 = vector.load %arg4[%c96, %c0_25] : memref<144x256xbf16, #tpu.memory_space<vmem>>, vector<16x126xbf16>
    tpu.vector_store %arg4[%c96, %c0_25], %28 {strides = array<i32>} : memref<144x256xbf16, #tpu.memory_space<vmem>>, vector<16x126xbf16>,
    %c0_26 = arith.constant 0 : index
    %c0_27 = arith.constant 0 : index
    %c3_28 = arith.constant 3 : index
    %30 = vector.load %arg1[%c0_26, %c0_27, %c3_28] : memref<2x16x128xf32, #tpu.memory_space<vmem>>, vector<1x16x125xf32>
    %31 = vector.shape_cast %30 : vector<1x16x125xf32> to vector<16x125xf32>
    %32 = arith.truncf %31 : vector<16x125xf32> to vector<16x125xbf16>
    %c112 = arith.constant 112 : index
    %c0_29 = arith.constant 0 : index
    %33 = vector.load %arg4[%c112, %c0_29] : memref<144x256xbf16, #tpu.memory_space<vmem>>, vector<16x125xbf16>
    tpu.vector_store %arg4[%c112, %c0_29], %32 {strides = array<i32>} : memref<144x256xbf16, #tpu.memory_space<vmem>>, vector<16x125xbf16>,
    %c0_30 = arith.constant 0 : index
    %c0_31 = arith.constant 0 : index
    %c4_32 = arith.constant 4 : index
    %34 = vector.load %arg1[%c0_30, %c0_31, %c4_32] : memref<2x16x128xf32, #tpu.memory_space<vmem>>, vector<1x16x124xf32>
    %35 = vector.shape_cast %34 : vector<1x16x124xf32> to vector<16x124xf32>
    %36 = arith.truncf %35 : vector<16x124xf32> to vector<16x124xbf16>
    %c128 = arith.constant 128 : index
    %c0_33 = arith.constant 0 : index
    %37 = vector.load %arg4[%c128, %c0_33] : memref<144x256xbf16, #tpu.memory_space<vmem>>, vector<16x124xbf16>
    tpu.vector_store %arg4[%c128, %c0_33], %36 {strides = array<i32>} : memref<144x256xbf16, #tpu.memory_space<vmem>>, vector<16x124xbf16>,
    %c1_34 = arith.constant 1 : index
    %c0_35 = arith.constant 0 : index
    %c0_36 = arith.constant 0 : index
    %38 = vector.load %arg1[%c1_34, %c0_35, %c0_36] : memref<2x16x128xf32, #tpu.memory_space<vmem>>, vector<1x16x124xf32>
    %39 = vector.shape_cast %38 : vector<1x16x124xf32> to vector<16x124xf32>
    %40 = arith.truncf %39 : vector<16x124xf32> to vector<16x124xbf16>
    %c0_37 = arith.constant 0 : index
    %c132 = arith.constant 132 : index
    %41 = vector.load %arg4[%c0_37, %c132] : memref<144x256xbf16, #tpu.memory_space<vmem>>, vector<16x124xbf16>
    tpu.vector_store %arg4[%c0_37, %c132], %40 {strides = array<i32>} : memref<144x256xbf16, #tpu.memory_space<vmem>>, vector<16x124xbf16>,
    %c1_38 = arith.constant 1 : index
    %c0_39 = arith.constant 0 : index
    %c0_40 = arith.constant 0 : index
    %42 = vector.load %arg1[%c1_38, %c0_39, %c0_40] : memref<2x16x128xf32, #tpu.memory_space<vmem>>, vector<1x16x125xf32>
    %43 = vector.shape_cast %42 : vector<1x16x125xf32> to vector<16x125xf32>
    %44 = arith.truncf %43 : vector<16x125xf32> to vector<16x125xbf16>
    %c16_41 = arith.constant 16 : index
    %c131 = arith.constant 131 : index
    %45 = vector.load %arg4[%c16_41, %c131] : memref<144x256xbf16, #tpu.memory_space<vmem>>, vector<16x125xbf16>
    tpu.vector_store %arg4[%c16_41, %c131], %44 {strides = array<i32>} : memref<144x256xbf16, #tpu.memory_space<vmem>>, vector<16x125xbf16>,
    %c1_42 = arith.constant 1 : index
    %c0_43 = arith.constant 0 : index
    %c0_44 = arith.constant 0 : index
    %46 = vector.load %arg1[%c1_42, %c0_43, %c0_44] : memref<2x16x128xf32, #tpu.memory_space<vmem>>, vector<1x16x126xf32>
    %47 = vector.shape_cast %46 : vector<1x16x126xf32> to vector<16x126xf32>
    %48 = arith.truncf %47 : vector<16x126xf32> to vector<16x126xbf16>
    %c32_45 = arith.constant 32 : index
    %c130 = arith.constant 130 : index
    %49 = vector.load %arg4[%c32_45, %c130] : memref<144x256xbf16, #tpu.memory_space<vmem>>, vector<16x126xbf16>
    tpu.vector_store %arg4[%c32_45, %c130], %48 {strides = array<i32>} : memref<144x256xbf16, #tpu.memory_space<vmem>>, vector<16x126xbf16>,
    %c1_46 = arith.constant 1 : index
    %c0_47 = arith.constant 0 : index
    %c0_48 = arith.constant 0 : index
    %50 = vector.load %arg1[%c1_46, %c0_47, %c0_48] : memref<2x16x128xf32, #tpu.memory_space<vmem>>, vector<1x16x127xf32>
    %51 = vector.shape_cast %50 : vector<1x16x127xf32> to vector<16x127xf32>
    %52 = arith.truncf %51 : vector<16x127xf32> to vector<16x127xbf16>
    %c48_49 = arith.constant 48 : index
    %c129 = arith.constant 129 : index
    %53 = vector.load %arg4[%c48_49, %c129] : memref<144x256xbf16, #tpu.memory_space<vmem>>, vector<16x127xbf16>
    tpu.vector_store %arg4[%c48_49, %c129], %52 {strides = array<i32>} : memref<144x256xbf16, #tpu.memory_space<vmem>>, vector<16x127xbf16>,
    %c1_50 = arith.constant 1 : index
    %c0_51 = arith.constant 0 : index
    %c0_52 = arith.constant 0 : index
    %54 = vector.load %arg1[%c1_50, %c0_51, %c0_52] : memref<2x16x128xf32, #tpu.memory_space<vmem>>, vector<1x16x128xf32>
    %55 = vector.shape_cast %54 : vector<1x16x128xf32> to vector<16x128xf32>
    %56 = arith.truncf %55 : vector<16x128xf32> to vector<16x128xbf16>
    %c64_53 = arith.constant 64 : index
    %c128_54 = arith.constant 128 : index
    %57 = vector.load %arg4[%c64_53, %c128_54] : memref<144x256xbf16, #tpu.memory_space<vmem>>, vector<16x128xbf16>
    tpu.vector_store %arg4[%c64_53, %c128_54], %56 {strides = array<i32>} : memref<144x256xbf16, #tpu.memory_space<vmem>>, vector<16x128xbf16>,
    %c1_55 = arith.constant 1 : index
    %c0_56 = arith.constant 0 : index
    %c1_57 = arith.constant 1 : index
    %58 = vector.load %arg1[%c1_55, %c0_56, %c1_57] : memref<2x16x128xf32, #tpu.memory_space<vmem>>, vector<1x16x127xf32>
    %59 = vector.shape_cast %58 : vector<1x16x127xf32> to vector<16x127xf32>
    %60 = arith.truncf %59 : vector<16x127xf32> to vector<16x127xbf16>
    %c80_58 = arith.constant 80 : index
    %c128_59 = arith.constant 128 : index
    %61 = vector.load %arg4[%c80_58, %c128_59] : memref<144x256xbf16, #tpu.memory_space<vmem>>, vector<16x127xbf16>
    tpu.vector_store %arg4[%c80_58, %c128_59], %60 {strides = array<i32>} : memref<144x256xbf16, #tpu.memory_space<vmem>>, vector<16x127xbf16>,
    %c1_60 = arith.constant 1 : index
    %c0_61 = arith.constant 0 : index
    %c2_62 = arith.constant 2 : index
    %62 = vector.load %arg1[%c1_60, %c0_61, %c2_62] : memref<2x16x128xf32, #tpu.memory_space<vmem>>, vector<1x16x126xf32>
    %63 = vector.shape_cast %62 : vector<1x16x126xf32> to vector<16x126xf32>
    %64 = arith.truncf %63 : vector<16x126xf32> to vector<16x126xbf16>
    %c96_63 = arith.constant 96 : index
    %c128_64 = arith.constant 128 : index
    %65 = vector.load %arg4[%c96_63, %c128_64] : memref<144x256xbf16, #tpu.memory_space<vmem>>, vector<16x126xbf16>
    tpu.vector_store %arg4[%c96_63, %c128_64], %64 {strides = array<i32>} : memref<144x256xbf16, #tpu.memory_space<vmem>>, vector<16x126xbf16>,
    %c1_65 = arith.constant 1 : index
    %c0_66 = arith.constant 0 : index
    %c3_67 = arith.constant 3 : index
    %66 = vector.load %arg1[%c1_65, %c0_66, %c3_67] : memref<2x16x128xf32, #tpu.memory_space<vmem>>, vector<1x16x125xf32>
    %67 = vector.shape_cast %66 : vector<1x16x125xf32> to vector<16x125xf32>
    %68 = arith.truncf %67 : vector<16x125xf32> to vector<16x125xbf16>
    %c112_68 = arith.constant 112 : index
    %c128_69 = arith.constant 128 : index
    %69 = vector.load %arg4[%c112_68, %c128_69] : memref<144x256xbf16, #tpu.memory_space<vmem>>, vector<16x125xbf16>
    tpu.vector_store %arg4[%c112_68, %c128_69], %68 {strides = array<i32>} : memref<144x256xbf16, #tpu.memory_space<vmem>>, vector<16x125xbf16>,
    %c1_70 = arith.constant 1 : index
    %c0_71 = arith.constant 0 : index
    %c4_72 = arith.constant 4 : index
    %70 = vector.load %arg1[%c1_70, %c0_71, %c4_72] : memref<2x16x128xf32, #tpu.memory_space<vmem>>, vector<1x16x124xf32>
    %71 = vector.shape_cast %70 : vector<1x16x124xf32> to vector<16x124xf32>
    %72 = arith.truncf %71 : vector<16x124xf32> to vector<16x124xbf16>
    %c128_73 = arith.constant 128 : index
    %c128_74 = arith.constant 128 : index
    %73 = vector.load %arg4[%c128_73, %c128_74] : memref<144x256xbf16, #tpu.memory_space<vmem>>, vector<16x124xbf16>
    tpu.vector_store %arg4[%c128_73, %c128_74], %72 {strides = array<i32>} : memref<144x256xbf16, #tpu.memory_space<vmem>>, vector<16x124xbf16>,
    %c0_75 = arith.constant 0 : index
    %c0_76 = arith.constant 0 : index
    %74 = vector.load %arg2[%c0_75, %c0_76] : memref<32x144xbf16, #tpu.memory_space<vmem>>, vector<32x144xbf16>
    %c0_77 = arith.constant 0 : index
    %c0_78 = arith.constant 0 : index
    %75 = vector.load %arg4[%c0_77, %c0_78] : memref<144x256xbf16, #tpu.memory_space<vmem>>, vector<144x256xbf16>
    %cst_79 = arith.constant dense<0.000000e+00> : vector<32x256xf32>
    %76 = tpu.matmul %74, %75, %cst_79 {dimension_numbers = #tpu.dot_dimension_numbers<[1], [0], [0], [1], [0, 0, 1, 1], [], []>} : vector<32x144xbf16>, vector<144x256xbf16>, vector<32x256xf32> -> vector<32x256xf32>
    %77 = vector.extract_strided_slice %76 {offsets = [0, 0], sizes = [32, 128], strides = [1, 1]} : vector<32x256xf32> to vector<32x128xf32>
    %c0_80 = arith.constant 0 : index
    %c0_81 = arith.constant 0 : index
    %c0_82 = arith.constant 0 : index
    %78 = vector.load %arg3[%c0_80, %c0_81, %c0_82] : memref<2x32x128xf32, #tpu.memory_space<vmem>>, vector<1x32x128xf32>
    %79 = vector.shape_cast %78 : vector<1x32x128xf32> to vector<32x128xf32>
    %80 = vector.shape_cast %77 : vector<32x128xf32> to vector<1x32x128xf32>
    tpu.vector_store %arg3[%c0_80, %c0_81, %c0_82], %80 {strides = array<i32>} : memref<2x32x128xf32, #tpu.memory_space<vmem>>, vector<1x32x128xf32>,
    %81 = vector.extract_strided_slice %76 {offsets = [0, 128], sizes = [32, 128], strides = [1, 1]} : vector<32x256xf32> to vector<32x128xf32>
    %c1_83 = arith.constant 1 : index
    %c0_84 = arith.constant 0 : index
    %c0_85 = arith.constant 0 : index
    %82 = vector.load %arg3[%c1_83, %c0_84, %c0_85] : memref<2x32x128xf32, #tpu.memory_space<vmem>>, vector<1x32x128xf32>
    %83 = vector.shape_cast %82 : vector<1x32x128xf32> to vector<32x128xf32>
    %84 = vector.shape_cast %81 : vector<32x128xf32> to vector<1x32x128xf32>
    tpu.vector_store %arg3[%c1_83, %c0_84, %c0_85], %84 {strides = array<i32>} : memref<2x32x128xf32, #tpu.memory_space<vmem>>, vector<1x32x128xf32>,
    return
  }
  func.func @transform_0(%arg0: i32) -> (i32, i32, i32) {
    %c0_i32 = arith.constant 0 : i32
    %c0_i32_0 = arith.constant 0 : i32
    %c0_i32_1 = arith.constant 0 : i32
    return %arg0, %c0_i32, %c0_i32_0 : i32, i32, i32
  }
  func.func @transform_1(%arg0: i32) -> (i32, i32) {
    %c0_i32 = arith.constant 0 : i32
    %c0_i32_0 = arith.constant 0 : i32
    %c0_i32_1 = arith.constant 0 : i32
    return %c0_i32, %c0_i32_0 : i32, i32
  }
  func.func @transform_2(%arg0: i32) -> (i32, i32, i32) {
    %c0_i32 = arith.constant 0 : i32
    %c0_i32_0 = arith.constant 0 : i32
    %c0_i32_1 = arith.constant 0 : i32
    return %arg0, %c0_i32, %c0_i32_0 : i32, i32, i32
  }
}

</mosaic_0001>

<llo_original>
// kernel: branch_conv1d_forward.1
$region0: #{branch_conv1d_forward.1}
  #allocation0 [shape = 'u32[]', space=smem, size = 0x4, offset = 0x4, fixed_abs, tag = 'smem constant byte address 0x4 - core index']
  #allocation1 [shape = 'u32[72,128]{1,0:T(1,128)}', space=vmem, size = 0x9000, scoped, tag = 'internal scratch']
  #allocation2 [shape = 'bf16[144,256]{1,0:T(8,128)(2,1)}', space=vmem, size = 0x12000, scoped, tag = 'scratch operand']
  %s0 = inlined_call_operand.hbm [shape: f32[2,16,128], index: 0, kind: input, shape index: {}]
  %s1 = inlined_call_operand.hbm [shape: bf16[32,144], index: 1, kind: input, shape index: {}]
  %s2 = inlined_call_operand.hbm [shape: f32[2,32,128], index: 2, kind: output, shape index: {}]
  %s3 = sld [smem:[#allocation0]]
  $region26: #{branch_conv1d_forward.1} parent=0
    _
  %s5 = ssub.s32 1, %s3
  %s6 = scalar_select 0, %s5, %s3
  $region1: #{branch_conv1d_forward.1} parent=0
    #allocation3 [shape = 'u8[16384]{0}', space=vmem, size = 0x4000, scoped, tag = 'input window, operand 0, single buffered']
    #allocation4 [shape = 's32[1]{0}', space=sflag, size = 0x4, scoped, tag = 'scoped memory for branch_conv1d_forward.1']
    #allocation5 [shape = 's32[1]{0}', space=sflag, size = 0x4, scoped, tag = 'scoped memory for branch_conv1d_forward.1']
    #allocation6 [shape = 'u8[16384]{0}', space=vmem, size = 0x4000, scoped, tag = 'input window, operand 1, single buffered']
    #allocation7 [shape = 's32[1]{0}', space=sflag, size = 0x4, scoped, tag = 'scoped memory for branch_conv1d_forward.1']
    #allocation8 [shape = 'u8[32768]{0}', space=vmem, size = 0x8000, scoped, tag = 'output window, operand 0, single buffered']
    %7 = vsyncpa [#allocation4], 0
    %8 = vsyncpa [#allocation7], 0
    %9 = vsyncpa [#allocation5], 0
    // Predicated region
    $region2: #{branch_conv1d_forward.1} parent=1 // pred_check
      _
    $region3: #{branch_conv1d_forward.1} parent=1 // pred_check_branch
      %11 = sbr.rel (0) target = $region5
    $region4: #{branch_conv1d_forward.1} parent=1 // pred_region
      %13 = vsyncadd [#allocation4], 0
      %s14 = sshll.u32 %s0, 4
      %s15 = int_to_ptr.hbm [resolvable:$true] %s14
      %s16 = sshll.u32 [#allocation3], 4
      %s17 = int_to_ptr.vmem [resolvable:$true] %s16
      %22 = dma.hbm_to_vmem [thread:$0]  %s15, 512, %s17, [#allocation4], 128, 128, 8
    $region5: #{branch_conv1d_forward.1} parent=1 // pred_fallthru
      _
    // Predicated region
    $region6: #{branch_conv1d_forward.1} parent=1 // pred_check
      _
    $region7: #{branch_conv1d_forward.1} parent=1 // pred_check_branch
      %24 = sbr.rel (0) target = $region9
    $region8: #{branch_conv1d_forward.1} parent=1 // pred_region
      %26 = vsyncadd [#allocation7], 0
      %s27 = sshll.u32 %s1, 4
      %s28 = int_to_ptr.hbm [resolvable:$true] %s27
      %s29 = sshll.u32 [#allocation6], 4
      %s30 = int_to_ptr.vmem [resolvable:$true] %s29
      %35 = dma.hbm_to_vmem [thread:$0]  %s28, 512, %s30, [#allocation7], 128, 128, 8
    $region9: #{branch_conv1d_forward.1} parent=1 // pred_fallthru
      _
    // Predicated region
    $region10: #{branch_conv1d_forward.1} parent=1 // pred_check
      _
    $region11: #{branch_conv1d_forward.1} parent=1 // pred_check_branch
      %37 = sbr.rel (0) target = $region13
    $region12: #{branch_conv1d_forward.1} parent=1 // pred_region
      %39 = dma.done [#allocation4], 512
    $region13: #{branch_conv1d_forward.1} parent=1 // pred_fallthru
      _
    // Predicated region
    $region14: #{branch_conv1d_forward.1} parent=1 // pred_check
      _
    $region15: #{branch_conv1d_forward.1} parent=1 // pred_check_branch
      %41 = sbr.rel (0) target = $region17
    $region16: #{branch_conv1d_forward.1} parent=1 // pred_region
      %43 = dma.done [#allocation7], 512
    $region17: #{branch_conv1d_forward.1} parent=1 // pred_fallthru
      _
    %45 = vst [vmem:[#allocation2] sm:$0xff] 0
    %46 = vst [vmem:[#allocation2 + $0x8] sm:$0xff] 0
    %47 = vst [vmem:[#allocation2 + $0x10] sm:$0xff] 0
    %48 = vst [vmem:[#allocation2 + $0x18] sm:$0xff] 0
    %49 = vst [vmem:[#allocation2 + $0x20] sm:$0xff] 0
    %50 = vst [vmem:[#allocation2 + $0x28] sm:$0xff] 0
    %51 = vst [vmem:[#allocation2 + $0x30] sm:$0xff] 0
    %52 = vst [vmem:[#allocation2 + $0x38] sm:$0xff] 0
    %53 = vst [vmem:[#allocation2 + $0x40] sm:$0xff] 0
    %54 = vst [vmem:[#allocation2 + $0x48] sm:$0xff] 0
    %55 = vst [vmem:[#allocation2 + $0x50] sm:$0xff] 0
    %56 = vst [vmem:[#allocation2 + $0x58] sm:$0xff] 0
    %57 = vst [vmem:[#allocation2 + $0x60] sm:$0xff] 0
    %58 = vst [vmem:[#allocation2 + $0x68] sm:$0xff] 0
    %59 = vst [vmem:[#allocation2 + $0x70] sm:$0xff] 0
    %60 = vst [vmem:[#allocation2 + $0x78] sm:$0xff] 0
    %61 = vst [vmem:[#allocation2 + $0x80] sm:$0xff] 0
    %62 = vst [vmem:[#allocation2 + $0x88] sm:$0xff] 0
    %v63 = vld [vmem:[#allocation3] sm:$0xff]
    %v64 = vld [vmem:[#allocation3 + $0x8] sm:$0xff]
    %v65 = vpack.c.bf16 %v63, %v63
    %v66 = vpack.c.bf16 %v64, %v64
    %69 = vrot.lane.b32.xlu0 %v65, 4
    %v70 = vpop.permute.xlu0 %69
    %71 = vrot.lane.b32.xlu0 %v66, 4
    %v72 = vpop.permute.xlu0 %71
    %vm75 = vcmask 1043488
    %76 = vst.msk [vmem:[#allocation2] sm:$0xf] %vm75, %v70
    %77 = vst.msk [vmem:[#allocation2 + $0x8] sm:$0xf] %vm75, %v72
    %v78 = vld [vmem:[#allocation3] sm:$0xff]
    %v79 = vld [vmem:[#allocation3 + $0x8] sm:$0xff]
    %v80 = vpack.c.bf16 %v78, %v78
    %v81 = vpack.c.bf16 %v79, %v79
    %84 = vrot.lane.b32.xlu0 %v80, 3
    %v85 = vpop.permute.xlu0 %84
    %86 = vrot.lane.b32.xlu0 %v81, 3
    %v87 = vpop.permute.xlu0 %86
    %vm90 = vcmask 1043480
    %91 = vst.msk [vmem:[#allocation2 + $0x10] sm:$0xf] %vm90, %v85
    %92 = vst.msk [vmem:[#allocation2 + $0x18] sm:$0xf] %vm90, %v87
    %v93 = vld [vmem:[#allocation3] sm:$0xff]
    %v94 = vld [vmem:[#allocation3 + $0x8] sm:$0xff]
    %v95 = vpack.c.bf16 %v93, %v93
    %v96 = vpack.c.bf16 %v94, %v94
    %99 = vrot.lane.b32.xlu0 %v95, 2
    %v100 = vpop.permute.xlu0 %99
    %101 = vrot.lane.b32.xlu0 %v96, 2
    %v102 = vpop.permute.xlu0 %101
    %vm105 = vcmask 1043472
    %106 = vst.msk [vmem:[#allocation2 + $0x20] sm:$0xf] %vm105, %v100
    %107 = vst.msk [vmem:[#allocation2 + $0x28] sm:$0xf] %vm105, %v102
    %v108 = vld [vmem:[#allocation3] sm:$0xff]
    %v109 = vld [vmem:[#allocation3 + $0x8] sm:$0xff]
    %v110 = vpack.c.bf16 %v108, %v108
    %v111 = vpack.c.bf16 %v109, %v109
    %114 = vrot.lane.b32.xlu0 %v110, 1
    %v115 = vpop.permute.xlu0 %114
    %116 = vrot.lane.b32.xlu0 %v111, 1
    %v117 = vpop.permute.xlu0 %116
    %vm120 = vcmask 1043464
    %121 = vst.msk [vmem:[#allocation2 + $0x30] sm:$0xf] %vm120, %v115
    %122 = vst.msk [vmem:[#allocation2 + $0x38] sm:$0xf] %vm120, %v117
    %v123 = vld [vmem:[#allocation3] sm:$0xff]
    %v124 = vld [vmem:[#allocation3 + $0x8] sm:$0xff]
    %v125 = vpack.c.bf16 %v123, %v123
    %v126 = vpack.c.bf16 %v124, %v124
    %127 = vst [vmem:[#allocation2 + $0x40] sm:$0xf] %v125
    %128 = vst [vmem:[#allocation2 + $0x48] sm:$0xf] %v126
    %v129 = vld [vmem:[#allocation3] sm:$0xff]
    %v130 = vld [vmem:[#allocation3 + $0x8] sm:$0xff]
    %v131 = vpack.c.bf16 %v129, %v129
    %v132 = vpack.c.bf16 %v130, %v130
    %135 = vrot.lane.b32.xlu0 %v131, 127
    %v136 = vpop.permute.xlu0 %135
    %137 = vrot.lane.b32.xlu0 %v132, 127
    %v138 = vpop.permute.xlu0 %137
    %vm141 = vcmask 1035264
    %142 = vst.msk [vmem:[#allocation2 + $0x50] sm:$0xf] %vm141, %v136
    %143 = vst.msk [vmem:[#allocation2 + $0x58] sm:$0xf] %vm141, %v138
    %v144 = vld [vmem:[#allocation3] sm:$0xff]
    %v145 = vld [vmem:[#allocation3 + $0x8] sm:$0xff]
    %v146 = vpack.c.bf16 %v144, %v144
    %v147 = vpack.c.bf16 %v145, %v145
    %150 = vrot.lane.b32.xlu0 %v146, 126
    %v151 = vpop.permute.xlu0 %150
    %152 = vrot.lane.b32.xlu0 %v147, 126
    %v153 = vpop.permute.xlu0 %152
    %vm156 = vcmask 1027072
    %157 = vst.msk [vmem:[#allocation2 + $0x60] sm:$0xf] %vm156, %v151
    %158 = vst.msk [vmem:[#allocation2 + $0x68] sm:$0xf] %vm156, %v153
    %v159 = vld [vmem:[#allocation3] sm:$0xff]
    %v160 = vld [vmem:[#allocation3 + $0x8] sm:$0xff]
    %v161 = vpack.c.bf16 %v159, %v159
    %v162 = vpack.c.bf16 %v160, %v160
    %165 = vrot.lane.b32.xlu0 %v161, 125
    %v166 = vpop.permute.xlu0 %165
    %167 = vrot.lane.b32.xlu0 %v162, 125
    %v168 = vpop.permute.xlu0 %167
    %vm171 = vcmask 1018880
    %172 = vst.msk [vmem:[#allocation2 + $0x70] sm:$0xf] %vm171, %v166
    %173 = vst.msk [vmem:[#allocation2 + $0x78] sm:$0xf] %vm171, %v168
    %v174 = vld [vmem:[#allocation3] sm:$0xff]
    %v175 = vld [vmem:[#allocation3 + $0x8] sm:$0xff]
    %v176 = vpack.c.bf16 %v174, %v174
    %v177 = vpack.c.bf16 %v175, %v175
    %180 = vrot.lane.b32.xlu0 %v176, 124
    %v181 = vpop.permute.xlu0 %180
    %182 = vrot.lane.b32.xlu0 %v177, 124
    %v183 = vpop.permute.xlu0 %182
    %vm186 = vcmask 1010688
    %187 = vst.msk [vmem:[#allocation2 + $0x80] sm:$0xf] %vm186, %v181
    %188 = vst.msk [vmem:[#allocation2 + $0x88] sm:$0xf] %vm186, %v183
    %s189 = scalar_lea.vmem [#allocation3], 16
    %v190 = vld [vmem:[%s189] sm:$0xff]
    %v191 = vld [vmem:[%s189 + $0x8] sm:$0xff]
    %v192 = vpack.c.bf16 %v190, %v190
    %v193 = vpack.c.bf16 %v191, %v191
    %196 = vrot.lane.b32.xlu0 %v192, 4
    %v197 = vpop.permute.xlu0 %196
    %198 = vrot.lane.b32.xlu0 %v193, 4
    %v199 = vpop.permute.xlu0 %198
    %202 = vst.msk [vmem:[#allocation2 + $0x4] sm:$0xf] %vm75, %v197
    %203 = vst.msk [vmem:[#allocation2 + $0xc] sm:$0xf] %vm75, %v199
    %v204 = vld [vmem:[%s189] sm:$0xff]
    %v205 = vld [vmem:[%s189 + $0x8] sm:$0xff]
    %v206 = vpack.c.bf16 %v204, %v204
    %v207 = vpack.c.bf16 %v205, %v205
    %210 = vrot.lane.b32.xlu0 %v206, 3
    %v211 = vpop.permute.xlu0 %210
    %212 = vrot.lane.b32.xlu0 %v207, 3
    %v213 = vpop.permute.xlu0 %212
    %216 = vst.msk [vmem:[#allocation2 + $0x14] sm:$0xf] %vm90, %v211
    %217 = vst.msk [vmem:[#allocation2 + $0x1c] sm:$0xf] %vm90, %v213
    %v218 = vld [vmem:[%s189] sm:$0xff]
    %v219 = vld [vmem:[%s189 + $0x8] sm:$0xff]
    %v220 = vpack.c.bf16 %v218, %v218
    %v221 = vpack.c.bf16 %v219, %v219
    %224 = vrot.lane.b32.xlu0 %v220, 2
    %v225 = vpop.permute.xlu0 %224
    %226 = vrot.lane.b32.xlu0 %v221, 2
    %v227 = vpop.permute.xlu0 %226
    %230 = vst.msk [vmem:[#allocation2 + $0x24] sm:$0xf] %vm105, %v225
    %231 = vst.msk [vmem:[#allocation2 + $0x2c] sm:$0xf] %vm105, %v227
    %v232 = vld [vmem:[%s189] sm:$0xff]
    %v233 = vld [vmem:[%s189 + $0x8] sm:$0xff]
    %v234 = vpack.c.bf16 %v232, %v232
    %v235 = vpack.c.bf16 %v233, %v233
    %238 = vrot.lane.b32.xlu0 %v234, 1
    %v239 = vpop.permute.xlu0 %238
    %240 = vrot.lane.b32.xlu0 %v235, 1
    %v241 = vpop.permute.xlu0 %240
    %244 = vst.msk [vmem:[#allocation2 + $0x34] sm:$0xf] %vm120, %v239
    %245 = vst.msk [vmem:[#allocation2 + $0x3c] sm:$0xf] %vm120, %v241
    %v246 = vld [vmem:[%s189] sm:$0xff]
    %v247 = vld [vmem:[%s189 + $0x8] sm:$0xff]
    %v248 = vpack.c.bf16 %v246, %v246
    %v249 = vpack.c.bf16 %v247, %v247
    %250 = vst [vmem:[#allocation2 + $0x44] sm:$0xf] %v248
    %251 = vst [vmem:[#allocation2 + $0x4c] sm:$0xf] %v249
    %v252 = vld [vmem:[%s189] sm:$0xff]
    %v253 = vld [vmem:[%s189 + $0x8] sm:$0xff]
    %v254 = vpack.c.bf16 %v252, %v252
    %v255 = vpack.c.bf16 %v253, %v253
    %258 = vrot.lane.b32.xlu0 %v254, 127
    %v259 = vpop.permute.xlu0 %258
    %260 = vrot.lane.b32.xlu0 %v255, 127
    %v261 = vpop.permute.xlu0 %260
    %264 = vst.msk [vmem:[#allocation2 + $0x54] sm:$0xf] %vm141, %v259
    %265 = vst.msk [vmem:[#allocation2 + $0x5c] sm:$0xf] %vm141, %v261
    %v266 = vld [vmem:[%s189] sm:$0xff]
    %v267 = vld [vmem:[%s189 + $0x8] sm:$0xff]
    %v268 = vpack.c.bf16 %v266, %v266
    %v269 = vpack.c.bf16 %v267, %v267
    %272 = vrot.lane.b32.xlu0 %v268, 126
    %v273 = vpop.permute.xlu0 %272
    %274 = vrot.lane.b32.xlu0 %v269, 126
    %v275 = vpop.permute.xlu0 %274
    %278 = vst.msk [vmem:[#allocation2 + $0x64] sm:$0xf] %vm156, %v273
    %279 = vst.msk [vmem:[#allocation2 + $0x6c] sm:$0xf] %vm156, %v275
    %v280 = vld [vmem:[%s189] sm:$0xff]
    %v281 = vld [vmem:[%s189 + $0x8] sm:$0xff]
    %v282 = vpack.c.bf16 %v280, %v280
    %v283 = vpack.c.bf16 %v281, %v281
    %286 = vrot.lane.b32.xlu0 %v282, 125
    %v287 = vpop.permute.xlu0 %286
    %288 = vrot.lane.b32.xlu0 %v283, 125
    %v289 = vpop.permute.xlu0 %288
    %292 = vst.msk [vmem:[#allocation2 + $0x74] sm:$0xf] %vm171, %v287
    %293 = vst.msk [vmem:[#allocation2 + $0x7c] sm:$0xf] %vm171, %v289
    %v294 = vld [vmem:[%s189] sm:$0xff]
    %v295 = vld [vmem:[%s189 + $0x8] sm:$0xff]
    %v296 = vpack.c.bf16 %v294, %v294
    %v297 = vpack.c.bf16 %v295, %v295
    %300 = vrot.lane.b32.xlu0 %v296, 124
    %v301 = vpop.permute.xlu0 %300
    %302 = vrot.lane.b32.xlu0 %v297, 124
    %v303 = vpop.permute.xlu0 %302
    %306 = vst.msk [vmem:[#allocation2 + $0x84] sm:$0xf] %vm186, %v301
    %307 = vst.msk [vmem:[#allocation2 + $0x8c] sm:$0xf] %vm186, %v303
    %v308 = vld [vmem:[#allocation6] sm:$0xff]
    %v309 = vld [vmem:[#allocation6 + $0x8] sm:$0xff]
    %v310 = vld [vmem:[#allocation6 + $0x10] sm:$0xff]
    %v311 = vld [vmem:[#allocation6 + $0x18] sm:$0xff]
    %v312 = vld [vmem:[#allocation2] sm:$0xff]
    %v313 = vld [vmem:[#allocation2 + $0x8] sm:$0xff]
    %v314 = vld [vmem:[#allocation2 + $0x10] sm:$0xff]
    %v315 = vld [vmem:[#allocation2 + $0x18] sm:$0xff]
    %v316 = vld [vmem:[#allocation2 + $0x20] sm:$0xff]
    %v317 = vld [vmem:[#allocation2 + $0x28] sm:$0xff]
    %v318 = vld [vmem:[#allocation2 + $0x30] sm:$0xff]
    %v319 = vld [vmem:[#allocation2 + $0x38] sm:$0xff]
    %v320 = vld [vmem:[#allocation2 + $0x40] sm:$0xff]
    %v321 = vld [vmem:[#allocation2 + $0x48] sm:$0xff]
    %v322 = vld [vmem:[#allocation2 + $0x50] sm:$0xff]
    %v323 = vld [vmem:[#allocation2 + $0x58] sm:$0xff]
    %v324 = vld [vmem:[#allocation2 + $0x60] sm:$0xff]
    %v325 = vld [vmem:[#allocation2 + $0x68] sm:$0xff]
    %v326 = vld [vmem:[#allocation2 + $0x70] sm:$0xff]
    %v327 = vld [vmem:[#allocation2 + $0x78] sm:$0xff]
    %v328 = vld [vmem:[#allocation2 + $0x80] sm:$0xff]
    %v329 = vld [vmem:[#allocation2 + $0x88] sm:$0xff]
    %v334 = vunpack.c.l.b16 %v308
    %v335 = vunpack.c.h.b16 %v308
    %v336 = vunpack.c.l.b16 %v309
    %v337 = vunpack.c.h.b16 %v309
    %v338 = vunpack.c.l.b16 %v310
    %v339 = vunpack.c.h.b16 %v310
    %v340 = vunpack.c.l.b16 %v311
    %v341 = vunpack.c.h.b16 %v311
    %v342 = vpack.c.b16 %v336, %v334
    %v343 = vpack.c.b16 %v337, %v335
    %v344 = vpack.c.b16 %v340, %v338
    %v345 = vpack.c.b16 %v341, %v339
    %v366 = vunpack.c.l.b16 %v312
    %v367 = vunpack.c.h.b16 %v312
    %v368 = vunpack.c.l.b16 %v313
    %v369 = vunpack.c.h.b16 %v313
    %v370 = vunpack.c.l.b16 %v314
    %v371 = vunpack.c.h.b16 %v314
    %v372 = vunpack.c.l.b16 %v315
    %v373 = vunpack.c.h.b16 %v315
    %v374 = vunpack.c.l.b16 %v316
    %v375 = vunpack.c.h.b16 %v316
    %v376 = vunpack.c.l.b16 %v317
    %v377 = vunpack.c.h.b16 %v317
    %v378 = vunpack.c.l.b16 %v318
    %v379 = vunpack.c.h.b16 %v318
    %v380 = vunpack.c.l.b16 %v319
    %v381 = vunpack.c.h.b16 %v319
    %v382 = vunpack.c.l.b16 %v320
    %v383 = vunpack.c.h.b16 %v320
    %v384 = vunpack.c.l.b16 %v321
    %v385 = vunpack.c.h.b16 %v321
    %v386 = vunpack.c.l.b16 %v322
    %v387 = vunpack.c.h.b16 %v322
    %v388 = vunpack.c.l.b16 %v323
    %v389 = vunpack.c.h.b16 %v323
    %v390 = vunpack.c.l.b16 %v324
    %v391 = vunpack.c.h.b16 %v324
    %v392 = vunpack.c.l.b16 %v325
    %v393 = vunpack.c.h.b16 %v325
    %v394 = vunpack.c.l.b16 %v326
    %v395 = vunpack.c.h.b16 %v326
    %v396 = vunpack.c.l.b16 %v327
    %v397 = vunpack.c.h.b16 %v327
    %v398 = vunpack.c.l.b16 %v328
    %v399 = vunpack.c.h.b16 %v328
    %v400 = vunpack.c.l.b16 %v329
    %v401 = vunpack.c.h.b16 %v329
    %v402 = vpack.c.b16 %v368, %v366
    %v403 = vpack.c.b16 %v369, %v367
    %v404 = vpack.c.b16 %v372, %v370
    %v405 = vpack.c.b16 %v373, %v371
    %v406 = vpack.c.b16 %v376, %v374
    %v407 = vpack.c.b16 %v377, %v375
    %v408 = vpack.c.b16 %v380, %v378
    %v409 = vpack.c.b16 %v381, %v379
    %v410 = vpack.c.b16 %v384, %v382
    %v411 = vpack.c.b16 %v385, %v383
    %v412 = vpack.c.b16 %v388, %v386
    %v413 = vpack.c.b16 %v389, %v387
    %v414 = vpack.c.b16 %v392, %v390
    %v415 = vpack.c.b16 %v393, %v391
    %v416 = vpack.c.b16 %v396, %v394
    %v417 = vpack.c.b16 %v397, %v395
    %v418 = vpack.c.b16 %v400, %v398
    %v419 = vpack.c.b16 %v401, %v399
    %vm438 = vcmask 130048
    %v440 = vsel %vm438, %v343, 0
    %v443 = vsel %vm438, %v345, 0
    %445 = vmatpush.bf16.msra.mxu0 %v416
    %446 = vmatpush.bf16.msra.mxu0 %v414
    %447 = vmatpush.bf16.msra.mxu0 %v412
    %448 = vmatpush.bf16.msra.mxu0 %v410
    %449 = vmatpush.bf16.msra.mxu0 %v408
    %450 = vmatpush.bf16.msra.mxu0 %v406
    %451 = vmatpush.bf16.msra.mxu0 %v404
    %452 = vmatpush.bf16.msra.mxu0 %v402
    %453 = vmatmul.bf16.gmra.mxu0 %v342
    %v454 = vpop.f32.mrf.mxu0
    %v455 = vadd.f32 0.0, %v454
    %v456 = vpop.f32.mrf.mxu0
    %v457 = vadd.f32 0.0, %v456
    %458 = vmatmul.bf16.gmra.mxu0 %v344
    %v459 = vpop.f32.mrf.mxu0
    %v460 = vadd.f32 0.0, %v459
    %v461 = vpop.f32.mrf.mxu0
    %v462 = vadd.f32 0.0, %v461
    %463 = vdwg.mxu0
    %464 = vmatpush.bf16.msra.mxu0 0
    %465 = vmatpush.bf16.msra.mxu0 0
    %466 = vmatpush.bf16.msra.mxu0 0
    %467 = vmatpush.bf16.msra.mxu0 0
    %468 = vmatpush.bf16.msra.mxu0 0
    %469 = vmatpush.bf16.msra.mxu0 0
    %470 = vmatpush.bf16.msra.mxu0 0
    %471 = vmatpush.bf16.msra.mxu0 %v418
    %472 = vmatmul.bf16.gmra.mxu0 %v440
    %v473 = vpop.f32.mrf.mxu0
    %v474 = vadd.f32 %v455, %v473
    %v475 = vpop.f32.mrf.mxu0
    %v476 = vadd.f32 %v457, %v475
    %477 = vmatmul.bf16.gmra.mxu0 %v443
    %v478 = vpop.f32.mrf.mxu0
    %v479 = vadd.f32 %v460, %v478
    %v480 = vpop.f32.mrf.mxu0
    %v481 = vadd.f32 %v462, %v480
    %482 = vdwg.mxu0
    %483 = vmatpush.bf16.msra.mxu0 %v417
    %484 = vmatpush.bf16.msra.mxu0 %v415
    %485 = vmatpush.bf16.msra.mxu0 %v413
    %486 = vmatpush.bf16.msra.mxu0 %v411
    %487 = vmatpush.bf16.msra.mxu0 %v409
    %488 = vmatpush.bf16.msra.mxu0 %v407
    %489 = vmatpush.bf16.msra.mxu0 %v405
    %490 = vmatpush.bf16.msra.mxu0 %v403
    %491 = vmatmul.bf16.gmra.mxu0 %v342
    %v492 = vpop.f32.mrf.mxu0
    %v493 = vadd.f32 0.0, %v492
    %v494 = vpop.f32.mrf.mxu0
    %v495 = vadd.f32 0.0, %v494
    %496 = vmatmul.bf16.gmra.mxu0 %v344
    %v497 = vpop.f32.mrf.mxu0
    %v498 = vadd.f32 0.0, %v497
    %v499 = vpop.f32.mrf.mxu0
    %v500 = vadd.f32 0.0, %v499
    %501 = vdwg.mxu0
    %502 = vmatpush.bf16.msra.mxu0 0
    %503 = vmatpush.bf16.msra.mxu0 0
    %504 = vmatpush.bf16.msra.mxu0 0
    %505 = vmatpush.bf16.msra.mxu0 0
    %506 = vmatpush.bf16.msra.mxu0 0
    %507 = vmatpush.bf16.msra.mxu0 0
    %508 = vmatpush.bf16.msra.mxu0 0
    %509 = vmatpush.bf16.msra.mxu0 %v419
    %510 = vmatmul.bf16.gmra.mxu0 %v440
    %v511 = vpop.f32.mrf.mxu0
    %v512 = vadd.f32 %v493, %v511
    %v513 = vpop.f32.mrf.mxu0
    %v514 = vadd.f32 %v495, %v513
    %515 = vmatmul.bf16.gmra.mxu0 %v443
    %v516 = vpop.f32.mrf.mxu0
    %v517 = vadd.f32 %v498, %v516
    %v518 = vpop.f32.mrf.mxu0
    %v519 = vadd.f32 %v500, %v518
    %520 = vdwg.mxu0
    %521 = vst [vmem:[#allocation8] sm:$0xff] %v474
    %522 = vst [vmem:[#allocation8 + $0x8] sm:$0xff] %v476
    %523 = vst [vmem:[#allocation8 + $0x10] sm:$0xff] %v479
    %524 = vst [vmem:[#allocation8 + $0x18] sm:$0xff] %v481
    %s525 = scalar_lea.vmem [#allocation8], 32
    %526 = vst [vmem:[%s525] sm:$0xff] %v512
    %527 = vst [vmem:[%s525 + $0x8] sm:$0xff] %v514
    %528 = vst [vmem:[%s525 + $0x10] sm:$0xff] %v517
    %529 = vst [vmem:[%s525 + $0x18] sm:$0xff] %v519
    // Predicated region
    $region18: #{branch_conv1d_forward.1} parent=1 // pred_check
      _
    $region19: #{branch_conv1d_forward.1} parent=1 // pred_check_branch
      %531 = sbr.rel (0) target = $region21
    $region20: #{branch_conv1d_forward.1} parent=1 // pred_region
      %533 = vsyncadd [#allocation5], 0
      %s534 = sshll.u32 [#allocation8], 4
      %s535 = int_to_ptr.vmem [resolvable:$true] %s534
      %s536 = sshll.u32 %s2, 4
      %s537 = int_to_ptr.hbm [resolvable:$true] %s536
      %542 = dma.vmem_to_hbm [thread:$0]  %s535, 1024, %s537, [#allocation5], 128, 128, 8
    $region21: #{branch_conv1d_forward.1} parent=1 // pred_fallthru
      _
    // Predicated region
    $region22: #{branch_conv1d_forward.1} parent=1 // pred_check
      _
    $region23: #{branch_conv1d_forward.1} parent=1 // pred_check_branch
      %544 = sbr.rel (0) target = $region25
    $region24: #{branch_conv1d_forward.1} parent=1 // pred_region
      %546 = dma.done [#allocation5], 1024
    $region25: #{branch_conv1d_forward.1} parent=1 // pred_fallthru
      _
    %547 = vsyncpa [#allocation4], 1
    %548 = vsyncpa [#allocation7], 1
    %549 = vsyncpa [#allocation5], 1

</llo_original>
